<compile_context>
chip_gen: v5e
topology: v5e:2x2
jax: 0.10.0
libtpu: 0.0.40
codegen_flags: <defaults>
</compile_context>

<pallas_src>
import functools
import math

import jax
import jax.numpy as jnp
import numpy as np
from jax import lax
from jax.experimental import pallas as pl
from jax.experimental.pallas import tpu as pltpu


def _round_up(x, m):
    return ((x + m - 1) // m) * m


# ---------------------------------------------------------------------------
# Performer helpers (pure-JAX glue).  The original repo's `prime` /
# `draw_orthogonal_random_matrix` are not part of the shown module source, so
# the standard FAVOR+ positive feature map is used; its constant factors
# cancel because q'/k' are subsequently normalized by their lane sums.
# ---------------------------------------------------------------------------
def draw_orthogonal_random_matrix(d, m, key):
    """Orthogonal random projection of shape (d_head, proj_dim)."""
    n_blocks = -(-m // d)
    keys = jax.random.split(key, n_blocks + 1)
    blocks = []
    for i in range(n_blocks):
        g = jax.random.normal(keys[i], (d, d), dtype=jnp.float32)
        q, _ = jnp.linalg.qr(g)
        blocks.append(q)
    mat = jnp.concatenate(blocks, axis=1)[:, :m]
    norms = jnp.linalg.norm(
        jax.random.normal(keys[-1], (m, d), dtype=jnp.float32), axis=1)
    return mat * norms[None, :]


def prime_sbhd(x, proj_matrix):
    """Positive random features phi(x): (S,B,H,d_head) -> (B,H,S,2*proj_dim).

    The (S,B,H)->(B,H,S) permutation is folded into the einsum output layout
    instead of a separate materialized transpose.
    """
    m = proj_matrix.shape[-1]
    data_normalizer = x.shape[-1] ** -0.25
    xn = x * data_normalizer
    u = jnp.einsum('sbhd,dm->bhsm', xn, proj_matrix)
    sq = 0.5 * jnp.sum(xn * xn, axis=-1)              # (S,B,H)
    sq = jnp.transpose(sq, (1, 2, 0))[..., None]      # (B,H,S,1)
    phi = jnp.concatenate([jnp.exp(u - sq), jnp.exp(-u - sq)], axis=-1)
    return phi / math.sqrt(2.0 * m)


# ---------------------------------------------------------------------------
# Pallas kernel 1: chunked (WY / UT-transform) delta-rule fast-weight memory.
#
# Per chunk of C timesteps with start state W0 (2M, D):
#   U = (I + strict_tril(bK K^T))^{-1} (bV - bK W0)      "pseudo values"
#   O = Q W0 + tril_incl(Q K^T) U                        chunk outputs
#   W = W0 + K^T U                                       new state
# where bK = beta*K, bV = beta*V (beta folded in the JAX wrapper).
# The unit-lower-triangular inverse uses log2(C) squaring steps of the
# nilpotent matrix N = -strict_tril(bK K^T):  (I - N)^{-1} = prod(I + N^2^j).
# ---------------------------------------------------------------------------
def _chunk_delta_kernel(q_ref, k_ref, bk_ref, bv_ref, o_ref, w_scr,
                        *, n_inv_steps):
    # q/k/bk: (C, F)  bv/o: (C, D)  w_scr: (F, D) carried across chunks.
    @pl.when(pl.program_id(1) == 0)
    def _():
        w_scr[...] = jnp.zeros_like(w_scr)

    q = q_ref[...]
    k = k_ref[...]
    bk = bk_ref[...]
    bv = bv_ref[...]
    w0 = w_scr[...]
    c = q.shape[0]

    row = lax.broadcasted_iota(jnp.int32, (c, c), 0)
    col = lax.broadcasted_iota(jnp.int32, (c, c), 1)

    # N = -strict_tril(bK K^T);  T = (I - N)^{-1}  via  prod_j (I + N^(2^j)).
    skk = jnp.einsum('if,jf->ij', bk, k, preferred_element_type=jnp.float32)
    n_mat = jnp.where(row > col, -skk, 0.0)
    t_mat = jnp.where(row == col, 1.0, 0.0) + n_mat
    p_mat = n_mat
    for _ in range(n_inv_steps - 1):
        p_mat = jnp.dot(p_mat, p_mat, preferred_element_type=jnp.float32)
        t_mat = t_mat + jnp.dot(t_mat, p_mat,
                                preferred_element_type=jnp.float32)

    # Pseudo values U = T (bV - bK W0).
    rhs = bv - jnp.dot(bk, w0, preferred_element_type=jnp.float32)    # (C, D)
    u = jnp.dot(t_mat, rhs, preferred_element_type=jnp.float32)       # (C, D)

    # Outputs O = Q W0 + tril_incl(Q K^T) U  (output uses the post-update W).
    aqk = jnp.einsum('if,jf->ij', q, k, preferred_element_type=jnp.float32)
    aqk = jnp.where(row >= col, aqk, 0.0)
    o = jnp.dot(q, w0, preferred_element_type=jnp.float32)
    o = o + jnp.dot(aqk, u, preferred_element_type=jnp.float32)
    o_ref[...] = o.astype(o_ref.dtype)

    # State carry: W = W0 + K^T U.
    w_scr[...] = w0 + jnp.einsum('cf,cd->fd', k, u,
                                 preferred_element_type=jnp.float32)


def chunked_delta_rule(q, k, bk, bv, *, chunk_size=128):
    """q,k,bk: (B,H,S,F); bv: (B,H,S,D) -> (B,H,S,D) delta-rule outputs."""
    B, H, S, F = q.shape
    D = bv.shape[-1]
    BH = B * H
    C = min(_round_up(chunk_size, 8), _round_up(S, 8))
    Sp = _round_up(S, C)
    n_chunks = Sp // C
    n_inv = max(1, int(math.ceil(math.log2(C))))

    def prep(x):
        x = x.reshape(BH, S, x.shape[-1]).astype(jnp.float32)
        if Sp != S:
            # zero-padded timesteps: k=bk=bv=0 => no state update, outputs
            # for padded rows are sliced off below.
            x = jnp.pad(x, ((0, 0), (0, Sp - S), (0, 0)))
        return x

    q3, k3, bk3, bv3 = prep(q), prep(k), prep(bk), prep(bv)

    def spec(feat):
        return pl.BlockSpec((pl.Squeezed(), C, feat), lambda n, c: (n, c, 0))

    # Advisory cost estimate so XLA can schedule surrounding ops sensibly.
    per_chunk_flops = (4 * C * C * F + 4 * (n_inv - 1) * C * C * C
                       + 6 * C * F * D + 4 * C * C * D)
    flops = int(BH * n_chunks * per_chunk_flops)
    bytes_accessed = int(4 * BH * Sp * (3 * F + 2 * D))

    kernel = functools.partial(_chunk_delta_kernel, n_inv_steps=n_inv)
    out = pl.pallas_call(
        kernel,
        out_shape=jax.ShapeDtypeStruct((BH, Sp, D), jnp.float32),
        grid_spec=pltpu.PrefetchScalarGridSpec(
            num_scalar_prefetch=0,
            grid=(BH, n_chunks),                      # flat B*H parallel axis
            in_specs=[spec(F), spec(F), spec(F), spec(D)],
            out_specs=spec(D),
            scratch_shapes=[pltpu.VMEM((F, D), jnp.float32)]),
        compiler_params=pltpu.CompilerParams(
            dimension_semantics=("parallel", "arbitrary"),
            vmem_limit_bytes=32 * 1024 * 1024),       # safe on v5e/v6e/v7x
        cost_estimate=pl.CostEstimate(flops=flops, transcendentals=0,
                                      bytes_accessed=bytes_accessed),
    )(q3, k3, bk3, bv3)
    return out[:, :S, :].reshape(B, H, S, D)


# ---------------------------------------------------------------------------
# Pallas kernel 2: tiled matmul (qkvb_net and o_net projections).
# ---------------------------------------------------------------------------
def _matmul_kernel(x_ref, w_ref, o_ref, acc_ref):
    @pl.when(pl.program_id(2) == 0)
    def _():
        acc_ref[...] = jnp.zeros_like(acc_ref)
    acc_ref[...] += jnp.dot(x_ref[...], w_ref[...],
                            preferred_element_type=jnp.float32)
    @pl.when(pl.program_id(2) == pl.num_programs(2) - 1)
    def _():
        o_ref[...] = acc_ref[...].astype(o_ref.dtype)


def pallas_matmul(x, w, *, tm=256, tn=256, tk=512):
    """x: (M, K), w: (K, N) -> (M, N) in f32, padded/tiled for any size."""
    M, K = x.shape
    K2, N = w.shape
    assert K == K2
    tm = min(tm, _round_up(M, 8))
    tn = min(tn, _round_up(N, 128))
    tk = min(tk, _round_up(K, 128))
    Mp, Kp, Np = _round_up(M, tm), _round_up(K, tk), _round_up(N, tn)
    xp = x.astype(jnp.float32)
    wp = w.astype(jnp.float32)
    if (Mp, Kp) != (M, K):
        xp = jnp.pad(xp, ((0, Mp - M), (0, Kp - K)))
    if (Kp, Np) != (K, N):
        wp = jnp.pad(wp, ((0, Kp - K), (0, Np - N)))
    out = pl.pallas_call(
        _matmul_kernel,
        out_shape=jax.ShapeDtypeStruct((Mp, Np), jnp.float32),
        grid_spec=pltpu.PrefetchScalarGridSpec(
            num_scalar_prefetch=0,
            grid=(Mp // tm, Np // tn, Kp // tk),
            in_specs=[pl.BlockSpec((tm, tk), lambda i, j, kk: (i, kk)),
                      pl.BlockSpec((tk, tn), lambda i, j, kk: (kk, j))],
            out_specs=pl.BlockSpec((tm, tn), lambda i, j, kk: (i, j)),
            scratch_shapes=[pltpu.VMEM((tm, tn), jnp.float32)]),
        compiler_params=pltpu.CompilerParams(
            dimension_semantics=("parallel", "parallel", "arbitrary")),
    )(xp, wp)
    return out[:M, :N]


# ---------------------------------------------------------------------------
# Pure-JAX sequential reference for the delta-rule recurrence (used only for
# a one-time self-check in __main__, NOT in the forward hot path).
# ---------------------------------------------------------------------------
def _delta_rule_reference(q, k, bk, bv):
    B, H, S, F = q.shape
    D = bv.shape[-1]

    def step(W, inp):
        q_t, k_t, bk_t, bv_t = inp
        u_t = bv_t - jnp.einsum('bhf,bhfd->bhd', bk_t, W)
        W = W + jnp.einsum('bhf,bhd->bhfd', k_t, u_t)
        o_t = jnp.einsum('bhf,bhfd->bhd', q_t, W)
        return W, o_t

    xs = tuple(jnp.moveaxis(x.astype(jnp.float32), 2, 0)
               for x in (q, k, bk, bv))
    W0 = jnp.zeros((B, H, F, D), jnp.float32)
    _, outs = jax.lax.scan(step, W0, xs)
    return jnp.moveaxis(outs, 0, 2)


# ---------------------------------------------------------------------------
# Full forward pass of CudaNormFastWeightPerformerLayer.
# ---------------------------------------------------------------------------
def layer_norm(x, g, b, eps=1e-5):
    mu = jnp.mean(x, -1, keepdims=True)
    var = jnp.mean((x - mu) ** 2, -1, keepdims=True)
    return (x - mu) / jnp.sqrt(var + eps) * g + b


def forward(h, params, proj_key, *, n_head, d_head, proj_dim, eps=1e-5,
            chunk_size=128, recurrence_fn=None):
    # h: (slen, bsz, d_model) float32
    S, B, d_model = h.shape
    H, D = n_head, d_head
    scale = 1.0 / math.sqrt(D)
    rec = (recurrence_fn if recurrence_fn is not None
           else functools.partial(chunked_delta_rule, chunk_size=chunk_size))

    # qkvb projection (tiled Pallas matmul), split, sigmoid on beta.
    qkvb = pallas_matmul(h.reshape(S * B, d_model), params['w_qkvb'].T)
    qkvb = qkvb.reshape(S, B, H, 3 * D + 1)
    q, k, v, beta = jnp.split(qkvb, [D, 2 * D, 3 * D], axis=-1)
    beta = jax.nn.sigmoid(beta)

    # Performer random features (redraw=True path) + sum-normalization.
    proj_matrix = draw_orthogonal_random_matrix(D, proj_dim, proj_key)
    qp = prime_sbhd(q, proj_matrix)                    # (B,H,S,2M)
    kp = prime_sbhd(k, proj_matrix)
    kp = kp / jnp.sum(kp, -1, keepdims=True)
    qp = qp / jnp.sum(qp, -1, keepdims=True)

    v_bhsd = jnp.transpose(v, (1, 2, 0, 3)).astype(jnp.float32)       # (B,H,S,D)
    beta_bhs = jnp.transpose(beta[..., 0], (1, 2, 0)).astype(jnp.float32)

    # Normalizer math hoisted out of the recurrence (same place the PyTorch
    # module computes it — outside the CUDA kernel): key cumsums, key_denom,
    # beta folding and the output denominator.
    acc = jnp.cumsum(kp, axis=2)                       # inclusive cumsum of k
    acc_excl = acc - kp                                # exclusive cumsum
    kd = jnp.einsum('bhsf,bhsf->bhs', acc_excl, kp)
    kd = kd.at[:, :, 0].set(1.0)                       # first step forced to 1
    beta_eff = beta_bhs * kd
    k_eff = kp / (kd + eps)[..., None]
    denom = jnp.einsum('bhsf,bhsf->bhs', acc, qp)[..., None]

    bk = beta_eff[..., None] * k_eff                   # beta folded into k / v
    bv = beta_eff[..., None] * v_bhsd

    # Hot path: chunked delta-rule fast-weight memory (Pallas kernel).
    out = rec(qp, k_eff, bk, bv)                       # (B,H,S,D)
    out = scale * out / (denom + eps)

    # (B,H,S,D) -> (S,B,H*D), output projection, residual + post-LayerNorm.
    layer_out = jnp.transpose(out, (2, 0, 1, 3)).reshape(S, B, H * D)
    attn_out = pallas_matmul(layer_out.reshape(S * B, H * D),
                             params['w_o'].T).reshape(S, B, d_model)
    # dropout / dropatt: identity in eval mode.
    # TODO(synk): mems / carry_over_fast_weight path not implemented.
    output = layer_norm(h + attn_out, params['ln_g'], params['ln_b'])
    return output


if __name__ == "__main__":
    # Small, forward-consistent shapes.
    slen, bsz = 8, 2
    n_head, d_model, d_head, proj_dim = 2, 32, 8, 16

    key = jax.random.PRNGKey(0)
    k1, k2, k3, k4, k5 = jax.random.split(key, 5)
    params = dict(
        w_qkvb=0.02 * jax.random.normal(
            k1, (n_head * (3 * d_head + 1), d_model), dtype=jnp.float32),
        w_o=0.02 * jax.random.normal(
            k2, (d_model, n_head * d_head), dtype=jnp.float32),
        ln_g=jnp.ones((d_model,), jnp.float32),
        ln_b=jnp.zeros((d_model,), jnp.float32),
    )
    h = jax.random.normal(k3, (slen, bsz, d_model), dtype=jnp.float32)

    # One-time correctness check of the chunked kernel against a pure-JAX
    # sequential scan (kept out of the forward hot path).
    B, H, S, F, D = bsz, n_head, slen, 2 * proj_dim, d_head
    ck = jax.random.split(k5, 4)
    kk = jax.nn.softmax(jax.random.normal(ck[0], (B, H, S, F)), axis=-1)
    qq = jax.nn.softmax(jax.random.normal(ck[1], (B, H, S, F)), axis=-1)
    vv = jax.random.normal(ck[2], (B, H, S, D), dtype=jnp.float32)
    bb = jax.nn.sigmoid(jax.random.normal(ck[3], (B, H, S, 1)))
    out_kernel = chunked_delta_rule(qq, kk, bb * kk, bb * vv)
    out_ref = _delta_rule_reference(qq, kk, bb * kk, bb * vv)
    np.testing.assert_allclose(np.asarray(out_kernel), np.asarray(out_ref),
                               rtol=2e-2, atol=1e-3)

    # Full layer forward (Pallas hot path).
    out = forward(h, params, k4, n_head=n_head, d_head=d_head,
                  proj_dim=proj_dim)
    out = jax.block_until_ready(out)
    assert out.shape == (slen, bsz, d_model)
    assert bool(jnp.all(jnp.isfinite(out)))
    print("KERNEL_OK")
</pallas_src>

<mosaic_0001>
module attributes {stable_mosaic.version = 11 : i64} {
  func.func @_chunk_delta_kernel(%arg0: i32, %arg1: i32, %arg2: memref<1x8x32xf32, #tpu.memory_space<vmem>>, %arg3: memref<1x8x32xf32, #tpu.memory_space<vmem>>, %arg4: memref<1x8x32xf32, #tpu.memory_space<vmem>>, %arg5: memref<1x8x8xf32, #tpu.memory_space<vmem>>, %arg6: memref<1x8x8xf32, #tpu.memory_space<vmem>>, %arg7: memref<32x8xf32, #tpu.memory_space<vmem>>) attributes {dimension_semantics = [#tpu.dimension_semantics<parallel>, #tpu.dimension_semantics<arbitrary>], iteration_bounds = array<i64: 4, 1>, scalar_prefetch = 0 : i64, scratch_operands = 1 : i64, tpu.core_type = #tpu.core_type<tc>, window_params = [{transform_indices = @transform_0, window_bounds = array<i64: 1, 8, 32>}, {transform_indices = @transform_1, window_bounds = array<i64: 1, 8, 32>}, {transform_indices = @transform_2, window_bounds = array<i64: 1, 8, 32>}, {transform_indices = @transform_3, window_bounds = array<i64: 1, 8, 8>}, {transform_indices = @transform_4, window_bounds = array<i64: 1, 8, 8>}]} {
    %c0_i32 = arith.constant 0 : i32
    %0 = arith.cmpi eq, %arg1, %c0_i32 : i32
    %1 = arith.extui %0 : i1 to i32
    %c0_i32_0 = arith.constant 0 : i32
    %2 = arith.cmpi ne, %1, %c0_i32_0 : i32
    scf.if %2 {
      %cst_34 = arith.constant 0.000000e+00 : f32
      %47 = vector.broadcast %cst_34 : f32 to vector<32x8xf32>
      %c0_35 = arith.constant 0 : index
      %c0_36 = arith.constant 0 : index
      %48 = vector.load %arg7[%c0_35, %c0_36] : memref<32x8xf32, #tpu.memory_space<vmem>>, vector<32x8xf32>
      tpu.vector_store %arg7[%c0_35, %c0_36], %47 {strides = array<i32>} : memref<32x8xf32, #tpu.memory_space<vmem>>, vector<32x8xf32>,
    } else {
    }
    %c0 = arith.constant 0 : index
    %c0_1 = arith.constant 0 : index
    %c0_2 = arith.constant 0 : index
    %3 = vector.load %arg2[%c0, %c0_1, %c0_2] : memref<1x8x32xf32, #tpu.memory_space<vmem>>, vector<1x8x32xf32>
    %4 = vector.shape_cast %3 : vector<1x8x32xf32> to vector<8x32xf32>
    %c0_3 = arith.constant 0 : index
    %c0_4 = arith.constant 0 : index
    %c0_5 = arith.constant 0 : index
    %5 = vector.load %arg3[%c0_3, %c0_4, %c0_5] : memref<1x8x32xf32, #tpu.memory_space<vmem>>, vector<1x8x32xf32>
    %6 = vector.shape_cast %5 : vector<1x8x32xf32> to vector<8x32xf32>
    %c0_6 = arith.constant 0 : index
    %c0_7 = arith.constant 0 : index
    %c0_8 = arith.constant 0 : index
    %7 = vector.load %arg4[%c0_6, %c0_7, %c0_8] : memref<1x8x32xf32, #tpu.memory_space<vmem>>, vector<1x8x32xf32>
    %8 = vector.shape_cast %7 : vector<1x8x32xf32> to vector<8x32xf32>
    %c0_9 = arith.constant 0 : index
    %c0_10 = arith.constant 0 : index
    %c0_11 = arith.constant 0 : index
    %9 = vector.load %arg5[%c0_9, %c0_10, %c0_11] : memref<1x8x8xf32, #tpu.memory_space<vmem>>, vector<1x8x8xf32>
    %10 = vector.shape_cast %9 : vector<1x8x8xf32> to vector<8x8xf32>
    %c0_12 = arith.constant 0 : index
    %c0_13 = arith.constant 0 : index
    %11 = vector.load %arg7[%c0_12, %c0_13] : memref<32x8xf32, #tpu.memory_space<vmem>>, vector<32x8xf32>
    %12 = tpu.iota {dimensions = array<i32: 0>} : vector<8x8xi32>
    %13 = tpu.iota {dimensions = array<i32: 1>} : vector<8x8xi32>
    "tpu.trace_start"() <{level = 10 : i32, message = "if,jf->ij"}> : () -> ()
    %cst = arith.constant dense<0.000000e+00> : vector<8x8xf32>
    %14 = tpu.matmul %8, %6, %cst {dimension_numbers = #tpu.dot_dimension_numbers<[1], [1], [0], [0], [0, 0, 1, 0], [], []>} : vector<8x32xf32>, vector<8x32xf32>, vector<8x8xf32> -> vector<8x8xf32>
    "tpu.trace_stop"() : () -> ()
    %15 = arith.cmpi sgt, %12, %13 : vector<8x8xi32>
    %cst_14 = arith.constant 0.000000e+00 : f32
    %16 = vector.broadcast %cst_14 : f32 to vector<8x8xf32>
    %17 = arith.subf %16, %14 : vector<8x8xf32>
    %cst_15 = arith.constant 0.000000e+00 : f32
    %18 = vector.broadcast %cst_15 : f32 to vector<8x8xf32>
    %19 = arith.select %15, %17, %18 : vector<8x8xi1>, vector<8x8xf32>
    %20 = arith.cmpi eq, %12, %13 : vector<8x8xi32>
    %cst_16 = arith.constant 1.000000e+00 : f32
    %cst_17 = arith.constant 0.000000e+00 : f32
    %21 = vector.broadcast %cst_16 : f32 to vector<8x8xf32>
    %22 = vector.broadcast %cst_17 : f32 to vector<8x8xf32>
    %23 = arith.select %20, %21, %22 : vector<8x8xi1>, vector<8x8xf32>
    %24 = arith.addf %23, %19 : vector<8x8xf32>
    %cst_18 = arith.constant dense<0.000000e+00> : vector<8x8xf32>
    %25 = tpu.matmul %19, %19, %cst_18 {dimension_numbers = #tpu.dot_dimension_numbers<[1], [0], [0], [1], [0, 0, 1, 1], [], []>} : vector<8x8xf32>, vector<8x8xf32>, vector<8x8xf32> -> vector<8x8xf32>
    %cst_19 = arith.constant dense<0.000000e+00> : vector<8x8xf32>
    %26 = tpu.matmul %24, %25, %cst_19 {dimension_numbers = #tpu.dot_dimension_numbers<[1], [0], [0], [1], [0, 0, 1, 1], [], []>} : vector<8x8xf32>, vector<8x8xf32>, vector<8x8xf32> -> vector<8x8xf32>
    %27 = arith.addf %24, %26 : vector<8x8xf32>
    %cst_20 = arith.constant dense<0.000000e+00> : vector<8x8xf32>
    %28 = tpu.matmul %25, %25, %cst_20 {dimension_numbers = #tpu.dot_dimension_numbers<[1], [0], [0], [1], [0, 0, 1, 1], [], []>} : vector<8x8xf32>, vector<8x8xf32>, vector<8x8xf32> -> vector<8x8xf32>
    %cst_21 = arith.constant dense<0.000000e+00> : vector<8x8xf32>
    %29 = tpu.matmul %27, %28, %cst_21 {dimension_numbers = #tpu.dot_dimension_numbers<[1], [0], [0], [1], [0, 0, 1, 1], [], []>} : vector<8x8xf32>, vector<8x8xf32>, vector<8x8xf32> -> vector<8x8xf32>
    %30 = arith.addf %27, %29 : vector<8x8xf32>
    %cst_22 = arith.constant dense<0.000000e+00> : vector<8x8xf32>
    %31 = tpu.matmul %8, %11, %cst_22 {dimension_numbers = #tpu.dot_dimension_numbers<[1], [0], [0], [1], [0, 0, 1, 1], [], []>} : vector<8x32xf32>, vector<32x8xf32>, vector<8x8xf32> -> vector<8x8xf32>
    %32 = arith.subf %10, %31 : vector<8x8xf32>
    %cst_23 = arith.constant dense<0.000000e+00> : vector<8x8xf32>
    %33 = tpu.matmul %30, %32, %cst_23 {dimension_numbers = #tpu.dot_dimension_numbers<[1], [0], [0], [1], [0, 0, 1, 1], [], []>} : vector<8x8xf32>, vector<8x8xf32>, vector<8x8xf32> -> vector<8x8xf32>
    "tpu.trace_start"() <{level = 10 : i32, message = "if,jf->ij"}> : () -> ()
    %cst_24 = arith.constant dense<0.000000e+00> : vector<8x8xf32>
    %34 = tpu.matmul %4, %6, %cst_24 {dimension_numbers = #tpu.dot_dimension_numbers<[1], [1], [0], [0], [0, 0, 1, 0], [], []>} : vector<8x32xf32>, vector<8x32xf32>, vector<8x8xf32> -> vector<8x8xf32>
    "tpu.trace_stop"() : () -> ()
    %35 = arith.cmpi sge, %12, %13 : vector<8x8xi32>
    %cst_25 = arith.constant 0.000000e+00 : f32
    %36 = vector.broadcast %cst_25 : f32 to vector<8x8xf32>
    %37 = arith.select %35, %34, %36 : vector<8x8xi1>, vector<8x8xf32>
    %cst_26 = arith.constant dense<0.000000e+00> : vector<8x8xf32>
    %38 = tpu.matmul %4, %11, %cst_26 {dimension_numbers = #tpu.dot_dimension_numbers<[1], [0], [0], [1], [0, 0, 1, 1], [], []>} : vector<8x32xf32>, vector<32x8xf32>, vector<8x8xf32> -> vector<8x8xf32>
    %cst_27 = arith.constant dense<0.000000e+00> : vector<8x8xf32>
    %39 = tpu.matmul %37, %33, %cst_27 {dimension_numbers = #tpu.dot_dimension_numbers<[1], [0], [0], [1], [0, 0, 1, 1], [], []>} : vector<8x8xf32>, vector<8x8xf32>, vector<8x8xf32> -> vector<8x8xf32>
    %40 = arith.addf %38, %39 : vector<8x8xf32>
    %c0_28 = arith.constant 0 : index
    %c0_29 = arith.constant 0 : index
    %c0_30 = arith.constant 0 : index
    %41 = vector.load %arg6[%c0_28, %c0_29, %c0_30] : memref<1x8x8xf32, #tpu.memory_space<vmem>>, vector<1x8x8xf32>
    %42 = vector.shape_cast %41 : vector<1x8x8xf32> to vector<8x8xf32>
    %43 = vector.shape_cast %40 : vector<8x8xf32> to vector<1x8x8xf32>
    tpu.vector_store %arg6[%c0_28, %c0_29, %c0_30], %43 {strides = array<i32>} : memref<1x8x8xf32, #tpu.memory_space<vmem>>, vector<1x8x8xf32>,
    "tpu.trace_start"() <{level = 10 : i32, message = "cf,cd->fd"}> : () -> ()
    %cst_31 = arith.constant dense<0.000000e+00> : vector<32x8xf32>
    %44 = tpu.matmul %6, %33, %cst_31 {dimension_numbers = #tpu.dot_dimension_numbers<[0], [0], [1], [1], [0, 1, 1, 1], [], []>} : vector<8x32xf32>, vector<8x8xf32>, vector<32x8xf32> -> vector<32x8xf32>
    "tpu.trace_stop"() : () -> ()
    %45 = arith.addf %11, %44 : vector<32x8xf32>
    %c0_32 = arith.constant 0 : index
    %c0_33 = arith.constant 0 : index
    %46 = vector.load %arg7[%c0_32, %c0_33] : memref<32x8xf32, #tpu.memory_space<vmem>>, vector<32x8xf32>
    tpu.vector_store %arg7[%c0_32, %c0_33], %45 {strides = array<i32>} : memref<32x8xf32, #tpu.memory_space<vmem>>, vector<32x8xf32>,
    return
  }
  func.func @transform_0(%arg0: i32, %arg1: i32) -> (i32, i32, i32) {
    %c0_i32 = arith.constant 0 : i32
    %c0_i32_0 = arith.constant 0 : i32
    return %arg0, %arg1, %c0_i32 : i32, i32, i32
  }
  func.func @transform_1(%arg0: i32, %arg1: i32) -> (i32, i32, i32) {
    %c0_i32 = arith.constant 0 : i32
    %c0_i32_0 = arith.constant 0 : i32
    return %arg0, %arg1, %c0_i32 : i32, i32, i32
  }
  func.func @transform_2(%arg0: i32, %arg1: i32) -> (i32, i32, i32) {
    %c0_i32 = arith.constant 0 : i32
    %c0_i32_0 = arith.constant 0 : i32
    return %arg0, %arg1, %c0_i32 : i32, i32, i32
  }
  func.func @transform_3(%arg0: i32, %arg1: i32) -> (i32, i32, i32) {
    %c0_i32 = arith.constant 0 : i32
    %c0_i32_0 = arith.constant 0 : i32
    return %arg0, %arg1, %c0_i32 : i32, i32, i32
  }
  func.func @transform_4(%arg0: i32, %arg1: i32) -> (i32, i32, i32) {
    %c0_i32 = arith.constant 0 : i32
    %c0_i32_0 = arith.constant 0 : i32
    return %arg0, %arg1, %c0_i32 : i32, i32, i32
  }
}

</mosaic_0001>

<llo_original>
// kernel: tpu_custom_call.1
$region0: #{tpu_custom_call.1}
  #allocation0 [shape = 'u32[]', space=smem, size = 0x4, offset = 0x4, fixed_abs, tag = 'smem constant byte address 0x4 - core index']
  #allocation1 [shape = 'u32[72,128]{1,0:T(1,128)}', space=vmem, size = 0x9000, scoped, tag = 'internal scratch']
  #allocation2 [shape = 'f32[32,8]{1,0:T(8,128)}', space=vmem, size = 0x4000, scoped, tag = 'scratch operand']
  %s0 = inlined_call_operand.hbm [shape: f32[4,8,32], index: 0, kind: input, shape index: {}]
  %s1 = inlined_call_operand.hbm [shape: f32[4,8,32], index: 1, kind: input, shape index: {}]
  %s2 = inlined_call_operand.hbm [shape: f32[4,8,32], index: 2, kind: input, shape index: {}]
  %s3 = inlined_call_operand.hbm [shape: f32[4,8,8], index: 3, kind: input, shape index: {}]
  %s4 = inlined_call_operand.hbm [shape: f32[4,8,8], index: 4, kind: output, shape index: {}]
  %s5 = sld [smem:[#allocation0]]
  $region69: #{tpu_custom_call.1} parent=0
    _
  %s7 = ssub.s32 1, %s5
  %s8 = scalar_select 0, %s7, %s5
  $region1: #{tpu_custom_call.1} parent=0
    #allocation3 [shape = 'u8[8192]{0}', space=vmem, size = 0x2000, scoped, tag = 'input window, operand 0']
    #allocation4 [shape = 's32[2]{0}', space=sflag, size = 0x8, scoped, tag = 'scoped memory for tpu_custom_call.1']
    #allocation5 [shape = 's32[2]{0}', space=sflag, size = 0x8, scoped, tag = 'scoped memory for tpu_custom_call.1']
    #allocation6 [shape = 'u8[8192]{0}', space=vmem, size = 0x2000, scoped, tag = 'input window, operand 1']
    #allocation7 [shape = 's32[2]{0}', space=sflag, size = 0x8, scoped, tag = 'scoped memory for tpu_custom_call.1']
    #allocation8 [shape = 'u8[8192]{0}', space=vmem, size = 0x2000, scoped, tag = 'input window, operand 2']
    #allocation9 [shape = 'u8[8192]{0}', space=vmem, size = 0x2000, scoped, tag = 'input window, operand 3']
    #allocation10 [shape = 's32[2]{0}', space=sflag, size = 0x8, scoped, tag = 'scoped memory for tpu_custom_call.1']
    #allocation11 [shape = 'u8[8192]{0}', space=vmem, size = 0x2000, scoped, tag = 'output window, operand 0']
    %9 = vsyncpa [#allocation4], 0
    %s10 = scalar_lea.sflag [#allocation4], 1
    %11 = vsyncpa %s10, 0
    %12 = vsyncpa [#allocation7], 0
    %s13 = scalar_lea.sflag [#allocation7], 1
    %14 = vsyncpa %s13, 0
    %15 = vsyncpa [#allocation10], 0
    %s16 = scalar_lea.sflag [#allocation10], 1
    %17 = vsyncpa %s16, 0
    %18 = vsyncpa [#allocation5], 0
    %s19 = scalar_lea.sflag [#allocation5], 1
    %20 = vsyncpa %s19, 0
    loop: start=0, step=1, limit=6
    $region2: #{tpu_custom_call.1} parent=1 // loop_pre_header
      _
    $region3: #{tpu_custom_call.1} parent=1 // loop_header
      %s22 = sphi 0, %s26
      %p23 = scmp.ge.s32.totalorder %s22, 6
      %s29 = sphi 0, %s41
      %s30 = sphi 0, %s37
      %s31 = sphi 0, %s29
      %s32 = sphi 0, %s30
      %s33 = sphi 0, %s31
      %s34 = sphi 0, %s32
      %s46 = sphi 0, %s48
      %s49 = sphi 0, %s46
      %s50 = sphi 0, %s49
      %s66 = sphi 0, %s50
      %s74 = sphi 0, %s76
      %s77 = sphi 0, %s74
      %s78 = sphi 0, %s77
      %s94 = sphi 0, %s78
      %s102 = sphi 0, %s104
      %s105 = sphi 0, %s102
      %s106 = sphi 0, %s105
      %s122 = sphi 0, %s106
      %s130 = sphi 0, %s132
      %s133 = sphi 0, %s130
      %s134 = sphi 0, %s133
      %s150 = sphi 0, %s134
      %s158 = sphi 0, %s160
      %s161 = sphi 0, %s158
      %s162 = sphi 0, %s161
      %s178 = sphi 0, %s162
    $region4: #{tpu_custom_call.1} parent=1 // loop_header_branch
      %25 = sbr.rel (%p23) target = $region8
    $region5: #{tpu_custom_call.1} parent=1 // loop_body
      %s27 = ssub.s32 %s22, 1
      %s28 = ssub.s32 %s22, 2
      %s35 = sadd.s32 1, %s30
      %p36 = scmp.ge.s32.totalorder %s35, 1
      %s37 = scalar_select %p36, 0, %s35
      %s38 = sadd.s32 1, %s29
      %s39 = scalar_select %p36, %s38, %s29
      %p40 = scmp.ge.s32.totalorder %s39, 4
      %s41 = scalar_select %p40, 0, %s39
      %s42 = ssub.s32 %s29, %s41
      %s43 = ssub.s32 %s30, %s37
      %s44 = sor.u32 %s42, %s43
      %p45 = scmp.eq.s32.totalorder %s44, 0
      %s47 = sadd.s32 %s46, 1
      %s48 = scalar_select %p45, %s46, %s47
      %p51 = pneg %p45
      %p52 = scmp.eq.s32.totalorder %s22, 3
      %p53 = por %p51, %p52
      %p54 = scmp.ne.s32.totalorder %s46, %s49
      %p55 = scmp.eq.s32.totalorder %s22, 0
      %p56 = por %p54, %p55
      %p57 = scmp.ne.s32.totalorder %s46, %s49
      %p58 = scmp.eq.s32.totalorder %s27, 3
      %p59 = por %p57, %p58
      %p60 = scmp.ne.s32.totalorder %s49, %s50
      %p61 = scmp.eq.s32.totalorder %s27, 0
      %p62 = por %p60, %p61
      %p63 = scmp.ne.s32.totalorder %s49, %s50
      %p64 = scmp.eq.s32.totalorder %s28, 3
      %p65 = por %p63, %p64
      %p67 = scmp.ne.s32.totalorder %s50, %s66
      %p68 = scmp.eq.s32.totalorder %s28, 0
      %p69 = por %p67, %p68
      %s70 = ssub.s32 %s29, %s41
      %s71 = ssub.s32 %s30, %s37
      %s72 = sor.u32 %s70, %s71
      %p73 = scmp.eq.s32.totalorder %s72, 0
      %s75 = sadd.s32 %s74, 1
      %s76 = scalar_select %p73, %s74, %s75
      %p79 = pneg %p73
      %p80 = scmp.eq.s32.totalorder %s22, 3
      %p81 = por %p79, %p80
      %p82 = scmp.ne.s32.totalorder %s74, %s77
      %p83 = scmp.eq.s32.totalorder %s22, 0
      %p84 = por %p82, %p83
      %p85 = scmp.ne.s32.totalorder %s74, %s77
      %p86 = scmp.eq.s32.totalorder %s27, 3
      %p87 = por %p85, %p86
      %p88 = scmp.ne.s32.totalorder %s77, %s78
      %p89 = scmp.eq.s32.totalorder %s27, 0
      %p90 = por %p88, %p89
      %p91 = scmp.ne.s32.totalorder %s77, %s78
      %p92 = scmp.eq.s32.totalorder %s28, 3
      %p93 = por %p91, %p92
      %p95 = scmp.ne.s32.totalorder %s78, %s94
      %p96 = scmp.eq.s32.totalorder %s28, 0
      %p97 = por %p95, %p96
      %s98 = ssub.s32 %s29, %s41
      %s99 = ssub.s32 %s30, %s37
      %s100 = sor.u32 %s98, %s99
      %p101 = scmp.eq.s32.totalorder %s100, 0
      %s103 = sadd.s32 %s102, 1
      %s104 = scalar_select %p101, %s102, %s103
      %p107 = pneg %p101
      %p108 = scmp.eq.s32.totalorder %s22, 3
      %p109 = por %p107, %p108
      %p110 = scmp.ne.s32.totalorder %s102, %s105
      %p111 = scmp.eq.s32.totalorder %s22, 0
      %p112 = por %p110, %p111
      %p113 = scmp.ne.s32.totalorder %s102, %s105
      %p114 = scmp.eq.s32.totalorder %s27, 3
      %p115 = por %p113, %p114
      %p116 = scmp.ne.s32.totalorder %s105, %s106
      %p117 = scmp.eq.s32.totalorder %s27, 0
      %p118 = por %p116, %p117
      %p119 = scmp.ne.s32.totalorder %s105, %s106
      %p120 = scmp.eq.s32.totalorder %s28, 3
      %p121 = por %p119, %p120
      %p123 = scmp.ne.s32.totalorder %s106, %s122
      %p124 = scmp.eq.s32.totalorder %s28, 0
      %p125 = por %p123, %p124
      %s126 = ssub.s32 %s29, %s41
      %s127 = ssub.s32 %s30, %s37
      %s128 = sor.u32 %s126, %s127
      %p129 = scmp.eq.s32.totalorder %s128, 0
      %s131 = sadd.s32 %s130, 1
      %s132 = scalar_select %p129, %s130, %s131
      %p135 = pneg %p129
      %p136 = scmp.eq.s32.totalorder %s22, 3
      %p137 = por %p135, %p136
      %p138 = scmp.ne.s32.totalorder %s130, %s133
      %p139 = scmp.eq.s32.totalorder %s22, 0
      %p140 = por %p138, %p139
      %p141 = scmp.ne.s32.totalorder %s130, %s133
      %p142 = scmp.eq.s32.totalorder %s27, 3
      %p143 = por %p141, %p142
      %p144 = scmp.ne.s32.totalorder %s133, %s134
      %p145 = scmp.eq.s32.totalorder %s27, 0
      %p146 = por %p144, %p145
      %p147 = scmp.ne.s32.totalorder %s133, %s134
      %p148 = scmp.eq.s32.totalorder %s28, 3
      %p149 = por %p147, %p148
      %p151 = scmp.ne.s32.totalorder %s134, %s150
      %p152 = scmp.eq.s32.totalorder %s28, 0
      %p153 = por %p151, %p152
      %s154 = ssub.s32 %s29, %s41
      %s155 = ssub.s32 %s30, %s37
      %s156 = sor.u32 %s154, %s155
      %p157 = scmp.eq.s32.totalorder %s156, 0
      %s159 = sadd.s32 %s158, 1
      %s160 = scalar_select %p157, %s158, %s159
      %p163 = pneg %p157
      %p164 = scmp.eq.s32.totalorder %s22, 3
      %p165 = por %p163, %p164
      %p166 = scmp.ne.s32.totalorder %s158, %s161
      %p167 = scmp.eq.s32.totalorder %s22, 0
      %p168 = por %p166, %p167
      %p169 = scmp.ne.s32.totalorder %s158, %s161
      %p170 = scmp.eq.s32.totalorder %s27, 3
      %p171 = por %p169, %p170
      %p172 = scmp.ne.s32.totalorder %s161, %s162
      %p173 = scmp.eq.s32.totalorder %s27, 0
      %p174 = por %p172, %p173
      %p175 = scmp.ne.s32.totalorder %s161, %s162
      %p176 = scmp.eq.s32.totalorder %s28, 3
      %p177 = por %p175, %p176
      %p179 = scmp.ne.s32.totalorder %s162, %s178
      %p180 = scmp.eq.s32.totalorder %s28, 0
      %p181 = por %p179, %p180
      %p182 = scmp.le.s32.totalorder 1, %s22
      %p183 = scmp.lt.s32.totalorder %s22, 5
      %p184 = pnand %p182, %p183
      %p185 = pneg %p184
      // Predicated region
      $region9: #{tpu_custom_call.1} parent=5 // pred_check
        _
      $region10: #{tpu_custom_call.1} parent=5 // pred_check_branch
        %187 = sbr.rel (%p184) target = $region12
      $region11: #{tpu_custom_call.1} parent=5 // pred_region
        %s188 = ssub.s32 %s22, 1
      $region12: #{tpu_custom_call.1} parent=5 // pred_fallthru
        _
      %p189 = scmp.lt.s32.totalorder %s22, 4
      // Predicated region
      $region13: #{tpu_custom_call.1} parent=5 // pred_check
        %p190 = pneg %p189
      $region14: #{tpu_custom_call.1} parent=5 // pred_check_branch
        %192 = sbr.rel (%p190) target = $region16
      $region15: #{tpu_custom_call.1} parent=5 // pred_region
        // Predicated region
        $region17: #{tpu_custom_call.1} parent=15 // pred_check
          %p193 = pneg %p56
        $region18: #{tpu_custom_call.1} parent=15 // pred_check_branch
          %195 = sbr.rel (%p193) target = $region20
        $region19: #{tpu_custom_call.1} parent=15 // pred_region
          %s196 = sand.u32 %s46, 1
          %s197 = scalar_lea.sflag [#allocation4], %s196
          %s198 = sand.u32 %s46, 1
          %s199 = smul.addr %s198, 8
          %s200 = scalar_lea.vmem [#allocation3], %s199
          %202 = vsyncadd %s197, 0
          %s203 = sadd.s32 %s30, %s29
          %s204 = smul.addr %s203, 8
          %s205 = scalar_lea.hbm %s0, %s204
          %s207 = sshll.u32 %s205, 4
          %s208 = int_to_ptr.hbm [resolvable:$true] %s207
          %s209 = sshll.u32 %s200, 4
          %s210 = int_to_ptr.vmem [resolvable:$true] %s209
          %212 = dma.hbm_to_vmem [thread:$0]  %s208, 128, %s210, %s197
        $region20: #{tpu_custom_call.1} parent=15 // pred_fallthru
          _
        // Predicated region
        $region21: #{tpu_custom_call.1} parent=15 // pred_check
          %p213 = pneg %p84
        $region22: #{tpu_custom_call.1} parent=15 // pred_check_branch
          %215 = sbr.rel (%p213) target = $region24
        $region23: #{tpu_custom_call.1} parent=15 // pred_region
          %s216 = sand.u32 %s22, 1
          %s217 = scalar_lea.sflag [#allocation7], %s216
          %s218 = sand.u32 %s74, 1
          %s219 = smul.addr %s218, 8
          %s220 = scalar_lea.vmem [#allocation6], %s219
          %222 = vsyncadd %s217, 0
          %s223 = sadd.s32 %s30, %s29
          %s224 = smul.addr %s223, 8
          %s225 = scalar_lea.hbm %s1, %s224
          %s227 = sshll.u32 %s225, 4
          %s228 = int_to_ptr.hbm [resolvable:$true] %s227
          %s229 = sshll.u32 %s220, 4
          %s230 = int_to_ptr.vmem [resolvable:$true] %s229
          %232 = dma.hbm_to_vmem [thread:$0]  %s228, 128, %s230, %s217
        $region24: #{tpu_custom_call.1} parent=15 // pred_fallthru
          _
        // Predicated region
        $region25: #{tpu_custom_call.1} parent=15 // pred_check
          %p233 = pneg %p112
        $region26: #{tpu_custom_call.1} parent=15 // pred_check_branch
          %235 = sbr.rel (%p233) target = $region28
        $region27: #{tpu_custom_call.1} parent=15 // pred_region
          %s236 = sand.u32 %s22, 1
          %s237 = scalar_lea.sflag [#allocation7], %s236
          %s238 = sand.u32 %s102, 1
          %s239 = smul.addr %s238, 8
          %s240 = scalar_lea.vmem [#allocation8], %s239
          %242 = vsyncadd %s237, 0
          %s243 = sadd.s32 %s30, %s29
          %s244 = smul.addr %s243, 8
          %s245 = scalar_lea.hbm %s2, %s244
          %s247 = sshll.u32 %s245, 4
          %s248 = int_to_ptr.hbm [resolvable:$true] %s247
          %s249 = sshll.u32 %s240, 4
          %s250 = int_to_ptr.vmem [resolvable:$true] %s249
          %252 = dma.hbm_to_vmem [thread:$0]  %s248, 128, %s250, %s237
        $region28: #{tpu_custom_call.1} parent=15 // pred_fallthru
          _
        // Predicated region
        $region29: #{tpu_custom_call.1} parent=15 // pred_check
          %p253 = pneg %p140
        $region30: #{tpu_custom_call.1} parent=15 // pred_check_branch
          %255 = sbr.rel (%p253) target = $region32
        $region31: #{tpu_custom_call.1} parent=15 // pred_region
          %s256 = sand.u32 %s130, 1
          %s257 = scalar_lea.sflag [#allocation10], %s256
          %s258 = sand.u32 %s130, 1
          %s259 = smul.addr %s258, 8
          %s260 = scalar_lea.vmem [#allocation9], %s259
          %262 = vsyncadd %s257, 0
          %s263 = sadd.s32 %s30, %s29
          %s264 = smul.addr %s263, 8
          %s265 = scalar_lea.hbm %s3, %s264
          %s267 = sshll.u32 %s265, 4
          %s268 = int_to_ptr.hbm [resolvable:$true] %s267
          %s269 = sshll.u32 %s260, 4
          %s270 = int_to_ptr.vmem [resolvable:$true] %s269
          %272 = dma.hbm_to_vmem [thread:$0]  %s268, 128, %s270, %s257
        $region32: #{tpu_custom_call.1} parent=15 // pred_fallthru
          _
      $region16: #{tpu_custom_call.1} parent=5 // pred_fallthru
        _
      %p273 = scmp.le.s32.totalorder 1, %s22
      %p274 = scmp.lt.s32.totalorder %s22, 5
      %p275 = pnand %p273, %p274
      %p276 = pneg %p275
      // Predicated region
      $region33: #{tpu_custom_call.1} parent=5 // pred_check
        _
      $region34: #{tpu_custom_call.1} parent=5 // pred_check_branch
        %278 = sbr.rel (%p275) target = $region36
      $region35: #{tpu_custom_call.1} parent=5 // pred_region
        %s279 = ssub.s32 %s22, 1
        %s280 = sand.u32 %s49, 1
        %s281 = scalar_lea.sflag [#allocation4], %s280
        %s282 = sand.u32 %s49, 1
        %s283 = smul.addr %s282, 8
        %s284 = scalar_lea.vmem [#allocation3], %s283
        // Predicated region
        $region37: #{tpu_custom_call.1} parent=35 // pred_check
          %p285 = pneg %p62
        $region38: #{tpu_custom_call.1} parent=35 // pred_check_branch
          %287 = sbr.rel (%p285) target = $region40
        $region39: #{tpu_custom_call.1} parent=35 // pred_region
          %289 = dma.done %s281, 128
        $region40: #{tpu_custom_call.1} parent=35 // pred_fallthru
          _
        %s290 = sand.u32 %s27, 1
        %s291 = scalar_lea.sflag [#allocation7], %s290
        %s292 = sand.u32 %s77, 1
        %s293 = smul.addr %s292, 8
        %s294 = scalar_lea.vmem [#allocation6], %s293
        // Predicated region
        $region41: #{tpu_custom_call.1} parent=35 // pred_check
          %p295 = pneg %p90
        $region42: #{tpu_custom_call.1} parent=35 // pred_check_branch
          %297 = sbr.rel (%p295) target = $region44
        $region43: #{tpu_custom_call.1} parent=35 // pred_region
          %299 = dma.done %s291, 128
        $region44: #{tpu_custom_call.1} parent=35 // pred_fallthru
          _
        %s300 = sand.u32 %s27, 1
        %s301 = scalar_lea.sflag [#allocation7], %s300
        %s302 = sand.u32 %s105, 1
        %s303 = smul.addr %s302, 8
        %s304 = scalar_lea.vmem [#allocation8], %s303
        // Predicated region
        $region45: #{tpu_custom_call.1} parent=35 // pred_check
          %p305 = pneg %p118
        $region46: #{tpu_custom_call.1} parent=35 // pred_check_branch
          %307 = sbr.rel (%p305) target = $region48
        $region47: #{tpu_custom_call.1} parent=35 // pred_region
          %309 = dma.done %s301, 128
        $region48: #{tpu_custom_call.1} parent=35 // pred_fallthru
          _
        %s310 = sand.u32 %s133, 1
        %s311 = scalar_lea.sflag [#allocation10], %s310
        %s312 = sand.u32 %s133, 1
        %s313 = smul.addr %s312, 8
        %s314 = scalar_lea.vmem [#allocation9], %s313
        // Predicated region
        $region49: #{tpu_custom_call.1} parent=35 // pred_check
          %p315 = pneg %p146
        $region50: #{tpu_custom_call.1} parent=35 // pred_check_branch
          %317 = sbr.rel (%p315) target = $region52
        $region51: #{tpu_custom_call.1} parent=35 // pred_region
          %319 = dma.done %s311, 128
        $region52: #{tpu_custom_call.1} parent=35 // pred_fallthru
          _
        %s320 = sand.u32 %s49, 1
        %s321 = scalar_lea.sflag [#allocation4], %s320
        %s322 = sand.u32 %s49, 1
        %s323 = smul.addr %s322, 8
        %s324 = scalar_lea.vmem [#allocation3], %s323
        %p325 = pneg %p62
        %p326 = pneg %p59
        %s327 = sand.u32 %s27, 1
        %s328 = scalar_lea.sflag [#allocation7], %s327
        %s329 = sand.u32 %s77, 1
        %s330 = smul.addr %s329, 8
        %s331 = scalar_lea.vmem [#allocation6], %s330
        %p332 = pneg %p90
        %p333 = pneg %p87
        %s334 = sand.u32 %s27, 1
        %s335 = scalar_lea.sflag [#allocation7], %s334
        %s336 = sand.u32 %s105, 1
        %s337 = smul.addr %s336, 8
        %s338 = scalar_lea.vmem [#allocation8], %s337
        %p339 = pneg %p118
        %p340 = pneg %p115
        %s341 = sand.u32 %s133, 1
        %s342 = scalar_lea.sflag [#allocation10], %s341
        %s343 = sand.u32 %s133, 1
        %s344 = smul.addr %s343, 8
        %s345 = scalar_lea.vmem [#allocation9], %s344
        %p346 = pneg %p146
        %p347 = pneg %p143
        %p348 = pneg %p174
        %p349 = pneg %p171
        %s350 = sand.u32 %s161, 1
        %s351 = scalar_lea.sflag [#allocation5], %s350
        %s352 = sand.u32 %s161, 1
        %s353 = smul.addr %s352, 8
        %s354 = scalar_lea.vmem [#allocation11], %s353
        %p355 = scmp.eq.s32.totalorder %s32, 0
        // Predicated region
        $region53: #{tpu_custom_call.1} parent=35 // pred_check
          %p356 = pneg %p355
        $region54: #{tpu_custom_call.1} parent=35 // pred_check_branch
          %358 = sbr.rel (%p356) target = $region56
        $region55: #{tpu_custom_call.1} parent=35 // pred_region
          %vm359 = vcmask 64512
          %360 = vst.msk [vmem:[#allocation2] sm:$0xff] %vm359, 0.0
          %361 = vst.msk [vmem:[#allocation2 + $0x8] sm:$0xff] %vm359, 0.0
          %362 = vst.msk [vmem:[#allocation2 + $0x10] sm:$0xff] %vm359, 0.0
          %363 = vst.msk [vmem:[#allocation2 + $0x18] sm:$0xff] %vm359, 0.0
        $region56: #{tpu_custom_call.1} parent=35 // pred_fallthru
          _
        %v364 = vld [vmem:[%s284] sm:$0xff]
        %v365 = vld [vmem:[%s294] sm:$0xff]
        %v366 = vld [vmem:[%s304] sm:$0xff]
        %v367 = vld [vmem:[%s314] sm:$0xff]
        %v368 = vld [vmem:[#allocation2] sm:$0xff]
        %v369 = vld [vmem:[#allocation2 + $0x8] sm:$0xff]
        %v370 = vld [vmem:[#allocation2 + $0x10] sm:$0xff]
        %v371 = vld [vmem:[#allocation2 + $0x18] sm:$0xff]
        %v372 = vlaneseq
        %v373 = vshrl.u32 %v372, 7
        %v374 = vlaneseq
        %v375 = vand.u32 %v374, 127
        %vm376 = vcmask 261120
        %v378 = vsel %vm376, %v366, 0
        %v381 = vsel %vm376, %v365, 0
        %383 = vmatpush.xpose.msra.mxu0 0.0
        %384 = vmatpush.xpose.msra.mxu0 0.0
        %385 = vmatpush.xpose.msra.mxu0 0.0
        %386 = vmatpush.xpose.msra.mxu0 0.0
        %387 = vmatpush.xpose.msra.mxu0 0.0
        %388 = vmatpush.xpose.msra.mxu0 0.0
        %389 = vmatpush.xpose.msra.mxu0 0.0
        %390 = vmatpush.xpose.msra.mxu0 0.0
        %391 = vmatpush.xpose.msra.mxu0 0.0
        %392 = vmatpush.xpose.msra.mxu0 0.0
        %393 = vmatpush.xpose.msra.mxu0 0.0
        %394 = vmatpush.xpose.msra.mxu0 0.0
        %395 = vmatpush.xpose.msra.mxu0 0.0
        %396 = vmatpush.xpose.msra.mxu0 0.0
        %397 = vmatpush.xpose.msra.mxu0 0.0
        %398 = vmatpush.xpose.msra.mxu0 %v381
        %399 = vmatmul.f32.gmra.mxu0 %v378
        %v400 = vpop.f32.mrf.mxu0
        %v401 = vadd.f32 0.0, %v400
        %402 = vdwg.mxu0
        %vm403 = vcmp.gt.s32.totalorder %v373, %v375
        %v404 = vsub.f32 0.0, %v401
        %v405 = vsel %vm403, %v404, 0.0
        %vm406 = vcmp.eq.s32.totalorder %v373, %v375
        %v407 = vsel %vm406, 1.0, 0.0
        %v408 = vadd.f32 %v407, %v405
        %vm409 = vcmask 64512
        %v411 = vsel %vm409, %v405, 0
        %413 = vmatpush.msra.mxu0 0.0
        %414 = vmatpush.msra.mxu0 0.0
        %415 = vmatpush.msra.mxu0 0.0
        %416 = vmatpush.msra.mxu0 0.0
        %417 = vmatpush.msra.mxu0 0.0
        %418 = vmatpush.msra.mxu0 0.0
        %419 = vmatpush.msra.mxu0 0.0
        %420 = vmatpush.msra.mxu0 0.0
        %421 = vmatpush.msra.mxu0 0.0
        %422 = vmatpush.msra.mxu0 0.0
        %423 = vmatpush.msra.mxu0 0.0
        %424 = vmatpush.msra.mxu0 0.0
        %425 = vmatpush.msra.mxu0 0.0
        %426 = vmatpush.msra.mxu0 0.0
        %427 = vmatpush.msra.mxu0 0.0
        %428 = vmatpush.msra.mxu0 %v405
        %429 = vmatmul.f32.gmra.mxu0 %v411
        %v430 = vpop.f32.mrf.mxu0
        %v431 = vadd.f32 0.0, %v430
        %432 = vdwg.mxu0
        %v434 = vsel %vm409, %v408, 0
        %436 = vmatpush.msra.mxu0 0.0
        %437 = vmatpush.msra.mxu0 0.0
        %438 = vmatpush.msra.mxu0 0.0
        %439 = vmatpush.msra.mxu0 0.0
        %440 = vmatpush.msra.mxu0 0.0
        %441 = vmatpush.msra.mxu0 0.0
        %442 = vmatpush.msra.mxu0 0.0
        %443 = vmatpush.msra.mxu0 0.0
        %444 = vmatpush.msra.mxu0 0.0
        %445 = vmatpush.msra.mxu0 0.0
        %446 = vmatpush.msra.mxu0 0.0
        %447 = vmatpush.msra.mxu0 0.0
        %448 = vmatpush.msra.mxu0 0.0
        %449 = vmatpush.msra.mxu0 0.0
        %450 = vmatpush.msra.mxu0 0.0
        %451 = vmatpush.msra.mxu0 %v431
        %452 = vmatmul.f32.gmra.mxu0 %v434
        %v453 = vpop.f32.mrf.mxu0
        %v454 = vadd.f32 0.0, %v453
        %455 = vdwg.mxu0
        %v456 = vadd.f32 %v408, %v454
        %v458 = vsel %vm409, %v431, 0
        %460 = vmatpush.msra.mxu0 0.0
        %461 = vmatpush.msra.mxu0 0.0
        %462 = vmatpush.msra.mxu0 0.0
        %463 = vmatpush.msra.mxu0 0.0
        %464 = vmatpush.msra.mxu0 0.0
        %465 = vmatpush.msra.mxu0 0.0
        %466 = vmatpush.msra.mxu0 0.0
        %467 = vmatpush.msra.mxu0 0.0
        %468 = vmatpush.msra.mxu0 0.0
        %469 = vmatpush.msra.mxu0 0.0
        %470 = vmatpush.msra.mxu0 0.0
        %471 = vmatpush.msra.mxu0 0.0
        %472 = vmatpush.msra.mxu0 0.0
        %473 = vmatpush.msra.mxu0 0.0
        %474 = vmatpush.msra.mxu0 0.0
        %475 = vmatpush.msra.mxu0 %v431
        %476 = vmatmul.f32.gmra.mxu0 %v458
        %v477 = vpop.f32.mrf.mxu0
        %v478 = vadd.f32 0.0, %v477
        %479 = vdwg.mxu0
        %v481 = vsel %vm409, %v456, 0
        %483 = vmatpush.msra.mxu0 0.0
        %484 = vmatpush.msra.mxu0 0.0
        %485 = vmatpush.msra.mxu0 0.0
        %486 = vmatpush.msra.mxu0 0.0
        %487 = vmatpush.msra.mxu0 0.0
        %488 = vmatpush.msra.mxu0 0.0
        %489 = vmatpush.msra.mxu0 0.0
        %490 = vmatpush.msra.mxu0 0.0
        %491 = vmatpush.msra.mxu0 0.0
        %492 = vmatpush.msra.mxu0 0.0
        %493 = vmatpush.msra.mxu0 0.0
        %494 = vmatpush.msra.mxu0 0.0
        %495 = vmatpush.msra.mxu0 0.0
        %496 = vmatpush.msra.mxu0 0.0
        %497 = vmatpush.msra.mxu0 0.0
        %498 = vmatpush.msra.mxu0 %v478
        %499 = vmatmul.f32.gmra.mxu0 %v481
        %v500 = vpop.f32.mrf.mxu0
        %v501 = vadd.f32 0.0, %v500
        %502 = vdwg.mxu0
        %v503 = vadd.f32 %v456, %v501
        %504 = vmatpush.msra.mxu0 0.0
        %505 = vmatpush.msra.mxu0 0.0
        %506 = vmatpush.msra.mxu0 0.0
        %507 = vmatpush.msra.mxu0 0.0
        %508 = vmatpush.msra.mxu0 0.0
        %509 = vmatpush.msra.mxu0 0.0
        %510 = vmatpush.msra.mxu0 0.0
        %511 = vmatpush.msra.mxu0 0.0
        %512 = vmatpush.msra.mxu0 0.0
        %513 = vmatpush.msra.mxu0 0.0
        %514 = vmatpush.msra.mxu0 0.0
        %515 = vmatpush.msra.mxu0 0.0
        %516 = vmatpush.msra.mxu0 %v371
        %517 = vmatpush.msra.mxu0 %v370
        %518 = vmatpush.msra.mxu0 %v369
        %519 = vmatpush.msra.mxu0 %v368
        %520 = vmatmul.f32.gmra.mxu0 %v378
        %v521 = vpop.f32.mrf.mxu0
        %v522 = vadd.f32 0.0, %v521
        %523 = vdwg.mxu0
        %v524 = vsub.f32 %v367, %v522
        %v526 = vsel %vm409, %v503, 0
        %528 = vmatpush.msra.mxu0 0.0
        %529 = vmatpush.msra.mxu0 0.0
        %530 = vmatpush.msra.mxu0 0.0
        %531 = vmatpush.msra.mxu0 0.0
        %532 = vmatpush.msra.mxu0 0.0
        %533 = vmatpush.msra.mxu0 0.0
        %534 = vmatpush.msra.mxu0 0.0
        %535 = vmatpush.msra.mxu0 0.0
        %536 = vmatpush.msra.mxu0 0.0
        %537 = vmatpush.msra.mxu0 0.0
        %538 = vmatpush.msra.mxu0 0.0
        %539 = vmatpush.msra.mxu0 0.0
        %540 = vmatpush.msra.mxu0 0.0
        %541 = vmatpush.msra.mxu0 0.0
        %542 = vmatpush.msra.mxu0 0.0
        %543 = vmatpush.msra.mxu0 %v524
        %544 = vmatmul.f32.gmra.mxu0 %v526
        %v545 = vpop.f32.mrf.mxu0
        %v546 = vadd.f32 0.0, %v545
        %547 = vdwg.mxu0
        %v549 = vsel %vm376, %v364, 0
        %551 = vmatpush.xpose.msra.mxu0 0.0
        %552 = vmatpush.xpose.msra.mxu0 0.0
        %553 = vmatpush.xpose.msra.mxu0 0.0
        %554 = vmatpush.xpose.msra.mxu0 0.0
        %555 = vmatpush.xpose.msra.mxu0 0.0
        %556 = vmatpush.xpose.msra.mxu0 0.0
        %557 = vmatpush.xpose.msra.mxu0 0.0
        %558 = vmatpush.xpose.msra.mxu0 0.0
        %559 = vmatpush.xpose.msra.mxu0 0.0
        %560 = vmatpush.xpose.msra.mxu0 0.0
        %561 = vmatpush.xpose.msra.mxu0 0.0
        %562 = vmatpush.xpose.msra.mxu0 0.0
        %563 = vmatpush.xpose.msra.mxu0 0.0
        %564 = vmatpush.xpose.msra.mxu0 0.0
        %565 = vmatpush.xpose.msra.mxu0 0.0
        %566 = vmatpush.xpose.msra.mxu0 %v381
        %567 = vmatmul.f32.gmra.mxu0 %v549
        %v568 = vpop.f32.mrf.mxu0
        %v569 = vadd.f32 0.0, %v568
        %570 = vdwg.mxu0
        %vm571 = vcmp.ge.s32.totalorder %v373, %v375
        %v572 = vsel %vm571, %v569, 0.0
        %v574 = vsel %vm409, %v572, 0
        %576 = vmatpush.msra.mxu0 0.0
        %577 = vmatpush.msra.mxu0 0.0
        %578 = vmatpush.msra.mxu0 0.0
        %579 = vmatpush.msra.mxu0 0.0
        %580 = vmatpush.msra.mxu0 0.0
        %581 = vmatpush.msra.mxu0 0.0
        %582 = vmatpush.msra.mxu0 0.0
        %583 = vmatpush.msra.mxu0 0.0
        %584 = vmatpush.msra.mxu0 0.0
        %585 = vmatpush.msra.mxu0 0.0
        %586 = vmatpush.msra.mxu0 0.0
        %587 = vmatpush.msra.mxu0 0.0
        %588 = vmatpush.msra.mxu0 0.0
        %589 = vmatpush.msra.mxu0 0.0
        %590 = vmatpush.msra.mxu0 0.0
        %591 = vmatpush.msra.mxu0 %v546
        %592 = vmatmul.f32.gmra.mxu0 %v574
        %v593 = vpop.f32.mrf.mxu0
        %v594 = vadd.f32 0.0, %v593
        %595 = vdwg.mxu0
        %596 = vmatpush.msra.mxu0 0.0
        %597 = vmatpush.msra.mxu0 0.0
        %598 = vmatpush.msra.mxu0 0.0
        %599 = vmatpush.msra.mxu0 0.0
        %600 = vmatpush.msra.mxu0 0.0
        %601 = vmatpush.msra.mxu0 0.0
        %602 = vmatpush.msra.mxu0 0.0
        %603 = vmatpush.msra.mxu0 0.0
        %604 = vmatpush.msra.mxu0 0.0
        %605 = vmatpush.msra.mxu0 0.0
        %606 = vmatpush.msra.mxu0 0.0
        %607 = vmatpush.msra.mxu0 0.0
        %608 = vmatpush.msra.mxu0 %v371
        %609 = vmatpush.msra.mxu0 %v370
        %610 = vmatpush.msra.mxu0 %v369
        %611 = vmatpush.msra.mxu0 %v368
        %612 = vmatmul.f32.gmra.mxu0 %v549
        %v613 = vpop.f32.mrf.mxu0
        %v614 = vadd.f32 %v594, %v613
        %615 = vdwg.mxu0
        %616 = vst.msk [vmem:[%s354] sm:$0xff] %vm409, %v614
        %617 = vxpose.xlu0.b32.start [1/16] %v365, 128
        %618 = vxpose.xlu0.b32.cont [2/16] 0.0, 128
        %619 = vxpose.xlu0.b32.cont [3/16] 0.0, 128
        %620 = vxpose.xlu0.b32.cont [4/16] 0.0, 128
        %621 = vxpose.xlu0.b32.cont [5/16] 0.0, 128
        %622 = vxpose.xlu0.b32.cont [6/16] 0.0, 128
        %623 = vxpose.xlu0.b32.cont [7/16] 0.0, 128
        %624 = vxpose.xlu0.b32.cont [8/16] 0.0, 128
        %625 = vxpose.xlu0.b32.cont [9/16] 0.0, 128
        %626 = vxpose.xlu0.b32.cont [10/16] 0.0, 128
        %627 = vxpose.xlu0.b32.cont [11/16] 0.0, 128
        %628 = vxpose.xlu0.b32.cont [12/16] 0.0, 128
        %629 = vxpose.xlu0.b32.cont [13/16] 0.0, 128
        %630 = vxpose.xlu0.b32.cont [14/16] 0.0, 128
        %631 = vxpose.xlu0.b32.cont [15/16] 0.0, 128
        %632 = vxpose.xlu0.b32.end [16/16] 0.0, 128
        %v633 = vpop.trf.xlu0
        %v634 = vpop.trf.xlu0
        %v635 = vpop.trf.xlu0
        %v636 = vpop.trf.xlu0
        %v637 = vpop.trf.xlu0
        %v638 = vpop.trf.xlu0
        %v639 = vpop.trf.xlu0
        %v640 = vpop.trf.xlu0
        %v641 = vpop.trf.xlu0
        %v642 = vpop.trf.xlu0
        %v643 = vpop.trf.xlu0
        %v644 = vpop.trf.xlu0
        %v645 = vpop.trf.xlu0
        %v646 = vpop.trf.xlu0
        %v647 = vpop.trf.xlu0
        %v648 = vpop.trf.xlu0
        %v650 = vsel %vm409, %v633, 0
        %v653 = vsel %vm409, %v634, 0
        %v656 = vsel %vm409, %v635, 0
        %v659 = vsel %vm409, %v636, 0
        %661 = vmatpush.msra.mxu0 0.0
        %662 = vmatpush.msra.mxu0 0.0
        %663 = vmatpush.msra.mxu0 0.0
        %664 = vmatpush.msra.mxu0 0.0
        %665 = vmatpush.msra.mxu0 0.0
        %666 = vmatpush.msra.mxu0 0.0
        %667 = vmatpush.msra.mxu0 0.0
        %668 = vmatpush.msra.mxu0 0.0
        %669 = vmatpush.msra.mxu0 0.0
        %670 = vmatpush.msra.mxu0 0.0
        %671 = vmatpush.msra.mxu0 0.0
        %672 = vmatpush.msra.mxu0 0.0
        %673 = vmatpush.msra.mxu0 0.0
        %674 = vmatpush.msra.mxu0 0.0
        %675 = vmatpush.msra.mxu0 0.0
        %676 = vmatpush.msra.mxu0 %v546
        %677 = vmatmul.f32.gmra.mxu0 %v650
        %v678 = vpop.f32.mrf.mxu0
        %v679 = vadd.f32 0.0, %v678
        %680 = vmatmul.f32.gmra.mxu0 %v653
        %v681 = vpop.f32.mrf.mxu0
        %v682 = vadd.f32 0.0, %v681
        %683 = vmatmul.f32.gmra.mxu0 %v656
        %v684 = vpop.f32.mrf.mxu0
        %v685 = vadd.f32 0.0, %v684
        %686 = vmatmul.f32.gmra.mxu0 %v659
        %v687 = vpop.f32.mrf.mxu0
        %v688 = vadd.f32 0.0, %v687
        %689 = vdwg.mxu0
        %v690 = vadd.f32 %v368, %v679
        %v691 = vadd.f32 %v369, %v682
        %v692 = vadd.f32 %v370, %v685
        %v693 = vadd.f32 %v371, %v688
        %694 = vst.msk [vmem:[#allocation2] sm:$0xff] %vm409, %v690
        %695 = vst.msk [vmem:[#allocation2 + $0x8] sm:$0xff] %vm409, %v691
        %696 = vst.msk [vmem:[#allocation2 + $0x10] sm:$0xff] %vm409, %v692
        %697 = vst.msk [vmem:[#allocation2 + $0x18] sm:$0xff] %vm409, %v693
        %s698 = sand.u32 %s161, 1
        %s699 = scalar_lea.sflag [#allocation5], %s698
        %s700 = sand.u32 %s161, 1
        %s701 = smul.addr %s700, 8
        %s702 = scalar_lea.vmem [#allocation11], %s701
        // Predicated region
        $region57: #{tpu_custom_call.1} parent=35 // pred_check
          %p703 = pneg %p171
        $region58: #{tpu_custom_call.1} parent=35 // pred_check_branch
          %705 = sbr.rel (%p703) target = $region60
        $region59: #{tpu_custom_call.1} parent=35 // pred_region
          %707 = vsyncadd %s699, 0
          %s708 = sadd.s32 %s32, %s31
          %s709 = smul.addr %s708, 8
          %s710 = scalar_lea.hbm %s4, %s709
          %s712 = sshll.u32 %s702, 4
          %s713 = int_to_ptr.vmem [resolvable:$true] %s712
          %s714 = sshll.u32 %s710, 4
          %s715 = int_to_ptr.hbm [resolvable:$true] %s714
          %717 = dma.vmem_to_hbm [thread:$0]  %s713, 128, %s715, %s699
        $region60: #{tpu_custom_call.1} parent=35 // pred_fallthru
          _
      $region36: #{tpu_custom_call.1} parent=5 // pred_fallthru
        _
      %p718 = scmp.le.s32.totalorder 2, %s22
      // Predicated region
      $region61: #{tpu_custom_call.1} parent=5 // pred_check
        %p719 = pneg %p718
      $region62: #{tpu_custom_call.1} parent=5 // pred_check_branch
        %721 = sbr.rel (%p719) target = $region64
      $region63: #{tpu_custom_call.1} parent=5 // pred_region
        %s722 = ssub.s32 %s22, 2
        // Predicated region
        $region65: #{tpu_custom_call.1} parent=63 // pred_check
          %p723 = pneg %p177
        $region66: #{tpu_custom_call.1} parent=63 // pred_check_branch
          %725 = sbr.rel (%p723) target = $region68
        $region67: #{tpu_custom_call.1} parent=63 // pred_region
          %s726 = sand.u32 %s162, 1
          %s727 = scalar_lea.sflag [#allocation5], %s726
          %s728 = sand.u32 %s162, 1
          %s729 = smul.addr %s728, 8
          %s730 = scalar_lea.vmem [#allocation11], %s729
          %732 = dma.done %s727, 128
        $region68: #{tpu_custom_call.1} parent=63 // pred_fallthru
          _
      $region64: #{tpu_custom_call.1} parent=5 // pred_fallthru
        _
    $region6: #{tpu_custom_call.1} parent=1 // loop_footer
      %s26 = sadd.s32 1, %s22
    $region7: #{tpu_custom_call.1} parent=1 // loop_footer_branch
      %21 = sbr.rel target = $region3
    $region8: #{tpu_custom_call.1} parent=1 // loop_exit
      _
    %733 = vsyncpa [#allocation4], 1
    %s734 = scalar_lea.sflag [#allocation4], 1
    %735 = vsyncpa %s734, 1
    %736 = vsyncpa [#allocation7], 1
    %s737 = scalar_lea.sflag [#allocation7], 1
    %738 = vsyncpa %s737, 1
    %739 = vsyncpa [#allocation10], 1
    %s740 = scalar_lea.sflag [#allocation10], 1
    %741 = vsyncpa %s740, 1
    %742 = vsyncpa [#allocation5], 1
    %s743 = scalar_lea.sflag [#allocation5], 1
    %744 = vsyncpa %s743, 1

</llo_original>
